<compile_context>
chip_gen: v7x
topology: tpu7x:2x2x1
jax: 0.10.0
libtpu: 0.0.40
codegen_flags: <defaults>
</compile_context>

<pallas_src>
import jax
import jax.numpy as jnp
from jax.experimental import pallas as pl
from jax.experimental.pallas import tpu as pltpu

LANE = 128                    # vreg lane width
SUBLANE = 8                   # f32 sublane quantum (2x for bf16, 4x for 1-byte)
TARGET_BLOCK_BYTES = 1 << 20  # ~1 MiB per input tile


def _sigmoid_kernel(x_ref, o_ref):
    x = x_ref[...]
    # bf16 / f32 compute in their native dtype; anything else upcasts to f32.
    if x.dtype not in (jnp.float32, jnp.bfloat16):
        x = x.astype(jnp.float32)
    # sigmoid(x) = 0.5 * (tanh(x / 2) + 1)  -- single EUP transcendental.
    y = 0.5 * (jnp.tanh(0.5 * x) + 1.0)
    o_ref[...] = y.astype(o_ref.dtype)


def _round_up(a: int, b: int) -> int:
    return ((a + b - 1) // b) * b


def pallas_sigmoid(x: jax.Array) -> jax.Array:
    """Elementwise sigmoid, shape/dtype preserving (matches nn.Sigmoid)."""
    orig_shape = x.shape
    orig_dtype = x.dtype
    n = x.size
    if n == 0:
        return x

    # NOTE: for tiny CBAM gate tensors a fused / plain-XLA sigmoid would avoid
    # kernel-launch latency entirely; the Pallas path is kept unconditional
    # here so the kernel itself is exercised.

    itemsize = jnp.dtype(orig_dtype).itemsize
    sub = SUBLANE * max(1, 4 // max(1, itemsize))  # 8 (f32) / 16 (bf16) / 32 (1B)

    # Flatten to a lane-dense (rows, 128) slab. Common case: numel is already
    # a multiple of 128 -> pure reshape, no extra HBM pass. Ragged case: pad
    # the flat vector up to the next lane multiple and slice on output.
    lane_rem = n % LANE
    needs_pad = lane_rem != 0
    x_flat = jnp.reshape(x, (-1,))
    if needs_pad:
        x_flat = jnp.pad(x_flat, (0, LANE - lane_rem))
    rows = x_flat.size // LANE
    x2d = jnp.reshape(x_flat, (rows, LANE))

    # Block sizing: ~1 MiB tiles, capped at ceil(rows/2) (rounded to the
    # sublane quantum) so there are >= 2 grid steps whenever possible (v7x
    # megacore). Tiny inputs use a single full-extent block.
    if rows <= sub:
        block_rows = rows  # full-extent leading dim is always a legal block
    else:
        target_rows = max(sub, (TARGET_BLOCK_BYTES // (LANE * itemsize)) // sub * sub)
        half_rows = _round_up(pl.cdiv(rows, 2), sub)
        block_rows = min(target_rows, half_rows)
    num_blocks = pl.cdiv(rows, block_rows)  # ragged last block is masked by Pallas

    out2d = pl.pallas_call(
        _sigmoid_kernel,
        out_shape=jax.ShapeDtypeStruct((rows, LANE), orig_dtype),
        grid_spec=pltpu.PrefetchScalarGridSpec(
            num_scalar_prefetch=0,
            grid=(num_blocks,),
            in_specs=[pl.BlockSpec((block_rows, LANE), lambda i: (i, 0))],
            out_specs=pl.BlockSpec((block_rows, LANE), lambda i: (i, 0)),
        ),
        compiler_params=pltpu.CompilerParams(
            dimension_semantics=("parallel",),
        ),
    )(x2d)

    if needs_pad:
        return jnp.reshape(jnp.reshape(out2d, (-1,))[:n], orig_shape)
    return jnp.reshape(out2d, orig_shape)


if __name__ == "__main__":
    key = jax.random.PRNGKey(0)

    # NCHW input matching the module usage: batch=2, channels=4, spatial=16.
    x = jax.random.normal(key, (2, 4, 16, 16), dtype=jnp.float32)
    out = jax.block_until_ready(pallas_sigmoid(x))
    ref = jax.nn.sigmoid(x)
    assert out.shape == x.shape and out.dtype == x.dtype
    assert jnp.allclose(out, ref, atol=2e-5, rtol=2e-5)

    # Extra shape coverage for the correctness fixes:
    # (a) rows not a multiple of block_rows -> masked ragged last block.
    k1, k2 = jax.random.split(key)
    x2 = jax.random.normal(k1, (5, 4, 128), dtype=jnp.float32)  # rows=20, block=16
    out2 = jax.block_until_ready(pallas_sigmoid(x2))
    assert jnp.allclose(out2, jax.nn.sigmoid(x2), atol=2e-5, rtol=2e-5)

    # (b) numel not a multiple of 128 -> padded path.
    x3 = jax.random.normal(k2, (2, 3, 13, 13), dtype=jnp.float32)
    out3 = jax.block_until_ready(pallas_sigmoid(x3))
    assert out3.shape == x3.shape
    assert jnp.allclose(out3, jax.nn.sigmoid(x3), atol=2e-5, rtol=2e-5)

    print("KERNEL_OK")
</pallas_src>

<mosaic_0001>
module attributes {stable_mosaic.version = 11 : i64} {
  func.func @_sigmoid_kernel(%arg0: i32, %arg1: memref<8x128xf32, #tpu.memory_space<vmem>>, %arg2: memref<8x128xf32, #tpu.memory_space<vmem>>) attributes {dimension_semantics = [#tpu.dimension_semantics<parallel>], iteration_bounds = array<i64: 2>, scalar_prefetch = 0 : i64, scratch_operands = 0 : i64, tpu.core_type = #tpu.core_type<tc>, window_params = [{transform_indices = @transform_0, window_bounds = array<i64: 8, 128>}, {transform_indices = @transform_1, window_bounds = array<i64: 8, 128>}]} {
    %c0 = arith.constant 0 : index
    %c0_0 = arith.constant 0 : index
    %0 = vector.load %arg1[%c0, %c0_0] : memref<8x128xf32, #tpu.memory_space<vmem>>, vector<8x128xf32>
    %cst = arith.constant 5.000000e-01 : f32
    %1 = vector.broadcast %cst : f32 to vector<8x128xf32>
    %2 = arith.mulf %1, %0 : vector<8x128xf32>
    %3 = math.tanh %2 : vector<8x128xf32>
    %cst_1 = arith.constant 1.000000e+00 : f32
    %4 = vector.broadcast %cst_1 : f32 to vector<8x128xf32>
    %5 = arith.addf %3, %4 : vector<8x128xf32>
    %cst_2 = arith.constant 5.000000e-01 : f32
    %6 = vector.broadcast %cst_2 : f32 to vector<8x128xf32>
    %7 = arith.mulf %6, %5 : vector<8x128xf32>
    %c0_3 = arith.constant 0 : index
    %c0_4 = arith.constant 0 : index
    %8 = vector.load %arg2[%c0_3, %c0_4] : memref<8x128xf32, #tpu.memory_space<vmem>>, vector<8x128xf32>
    tpu.vector_store %arg2[%c0_3, %c0_4], %7 {strides = array<i32>} : memref<8x128xf32, #tpu.memory_space<vmem>>, vector<8x128xf32>,
    return
  }
  func.func @transform_0(%arg0: i32) -> (i32, i32) {
    %c0_i32 = arith.constant 0 : i32
    %c0_i32_0 = arith.constant 0 : i32
    return %arg0, %c0_i32 : i32, i32
  }
  func.func @transform_1(%arg0: i32) -> (i32, i32) {
    %c0_i32 = arith.constant 0 : i32
    %c0_i32_0 = arith.constant 0 : i32
    return %arg0, %c0_i32 : i32, i32
  }
}

</mosaic_0001>

<llo_original>
// kernel: tpu_custom_call.1
$region0: #{tpu_custom_call.1}
  #allocation0 [shape = 'u32[]', space=smem, size = 0x4, offset = 0x4, fixed_abs, tag = 'smem constant byte address 0x4 - core index']
  #allocation1 [shape = 'u32[144,128]{1,0:T(1,128)}', space=vmem, size = 0x12000, scoped, tag = 'internal scratch']
  %s0 = inlined_call_operand.hbm [shape: f32[16,128], index: 0, kind: input, shape index: {}]
  %s1 = inlined_call_operand.hbm [shape: f32[16,128], index: 1, kind: output, shape index: {}]
  %s2 = sld [smem:[#allocation0]]
  $region41: #{tpu_custom_call.1} parent=0
    _
  %s4 = ssub.s32 1, %s2
  %s5 = scalar_select 0, %s4, %s2
  $region1: #{tpu_custom_call.1} parent=0
    #allocation2 [shape = 'u8[8192]{0}', space=vmem, size = 0x2000, scoped, tag = 'input window, operand 0']
    #allocation3 [shape = 's32[2]{0}', space=sflag, size = 0x8, scoped, tag = 'scoped memory for tpu_custom_call.1']
    #allocation4 [shape = 's32[2]{0}', space=sflag, size = 0x8, scoped, tag = 'scoped memory for tpu_custom_call.1']
    #allocation5 [shape = 'u8[8192]{0}', space=vmem, size = 0x2000, scoped, tag = 'output window, operand 0']
    %6 = vsyncpa [#allocation3], 0
    %s7 = scalar_lea.sflag [#allocation3], 1
    %8 = vsyncpa %s7, 0
    %9 = vsyncpa [#allocation4], 0
    %s10 = scalar_lea.sflag [#allocation4], 1
    %11 = vsyncpa %s10, 0
    loop: start=0, step=1, limit=4
    $region2: #{tpu_custom_call.1} parent=1 // loop_pre_header
      _
    $region3: #{tpu_custom_call.1} parent=1 // loop_header
      %s13 = sphi 0, %s17
      %p14 = scmp.ge.s32.totalorder %s13, 4
      %s23 = sphi 0, %s25
      %s26 = sphi 0, %s23
      %s27 = sphi 0, %s26
      %s43 = sphi 0, %s27
      %s49 = sphi 0, %s51
      %s52 = sphi 0, %s49
      %s53 = sphi 0, %s52
      %s69 = sphi 0, %s53
    $region4: #{tpu_custom_call.1} parent=1 // loop_header_branch
      %16 = sbr.rel (%p14) target = $region8
    $region5: #{tpu_custom_call.1} parent=1 // loop_body
      %s18 = ssub.s32 %s13, 1
      %s19 = ssub.s32 %s13, 2
      %s20 = sadd.s32 %s13, 1
      %s21 = ssub.s32 %s13, %s20
      %p22 = scmp.eq.s32.totalorder %s21, 0
      %s24 = sadd.s32 %s23, 1
      %s25 = scalar_select %p22, %s23, %s24
      %p28 = pneg %p22
      %p29 = scmp.eq.s32.totalorder %s13, 1
      %p30 = por %p28, %p29
      %p31 = scmp.ne.s32.totalorder %s23, %s26
      %p32 = scmp.eq.s32.totalorder %s13, 0
      %p33 = por %p31, %p32
      %p34 = scmp.ne.s32.totalorder %s23, %s26
      %p35 = scmp.eq.s32.totalorder %s18, 1
      %p36 = por %p34, %p35
      %p37 = scmp.ne.s32.totalorder %s26, %s27
      %p38 = scmp.eq.s32.totalorder %s18, 0
      %p39 = por %p37, %p38
      %p40 = scmp.ne.s32.totalorder %s26, %s27
      %p41 = scmp.eq.s32.totalorder %s19, 1
      %p42 = por %p40, %p41
      %p44 = scmp.ne.s32.totalorder %s27, %s43
      %p45 = scmp.eq.s32.totalorder %s19, 0
      %p46 = por %p44, %p45
      %s47 = ssub.s32 %s13, %s20
      %p48 = scmp.eq.s32.totalorder %s47, 0
      %s50 = sadd.s32 %s49, 1
      %s51 = scalar_select %p48, %s49, %s50
      %p54 = pneg %p48
      %p55 = scmp.eq.s32.totalorder %s13, 1
      %p56 = por %p54, %p55
      %p57 = scmp.ne.s32.totalorder %s49, %s52
      %p58 = scmp.eq.s32.totalorder %s13, 0
      %p59 = por %p57, %p58
      %p60 = scmp.ne.s32.totalorder %s49, %s52
      %p61 = scmp.eq.s32.totalorder %s18, 1
      %p62 = por %p60, %p61
      %p63 = scmp.ne.s32.totalorder %s52, %s53
      %p64 = scmp.eq.s32.totalorder %s18, 0
      %p65 = por %p63, %p64
      %p66 = scmp.ne.s32.totalorder %s52, %s53
      %p67 = scmp.eq.s32.totalorder %s19, 1
      %p68 = por %p66, %p67
      %p70 = scmp.ne.s32.totalorder %s53, %s69
      %p71 = scmp.eq.s32.totalorder %s19, 0
      %p72 = por %p70, %p71
      %p73 = scmp.le.s32.totalorder 1, %s13
      %p74 = scmp.lt.s32.totalorder %s13, 3
      %p75 = pnand %p73, %p74
      %p76 = pneg %p75
      // Predicated region
      $region9: #{tpu_custom_call.1} parent=5 // pred_check
        _
      $region10: #{tpu_custom_call.1} parent=5 // pred_check_branch
        %78 = sbr.rel (%p75) target = $region12
      $region11: #{tpu_custom_call.1} parent=5 // pred_region
        %s79 = ssub.s32 %s13, 1
      $region12: #{tpu_custom_call.1} parent=5 // pred_fallthru
        _
      %p80 = scmp.lt.s32.totalorder %s13, 2
      // Predicated region
      $region13: #{tpu_custom_call.1} parent=5 // pred_check
        %p81 = pneg %p80
      $region14: #{tpu_custom_call.1} parent=5 // pred_check_branch
        %83 = sbr.rel (%p81) target = $region16
      $region15: #{tpu_custom_call.1} parent=5 // pred_region
        // Predicated region
        $region17: #{tpu_custom_call.1} parent=15 // pred_check
          %p84 = pneg %p33
        $region18: #{tpu_custom_call.1} parent=15 // pred_check_branch
          %86 = sbr.rel (%p84) target = $region20
        $region19: #{tpu_custom_call.1} parent=15 // pred_region
          %s87 = sand.u32 %s23, 1
          %s88 = scalar_lea.sflag [#allocation3], %s87
          %s89 = sand.u32 %s23, 1
          %s90 = smul.addr %s89, 8
          %s91 = scalar_lea.vmem [#allocation2], %s90
          %s93 = ssub.s32 128, 128
          %94 = vsyncadd %s88, %s93
          %s95 = smul.addr %s13, 128
          %s96 = scalar_lea.hbm %s0, %s95
          %s98 = sshll.u32 %s91, 4
          %s99 = int_to_ptr.vmem [resolvable:$true] %s98
          %101 = dma.hbm_to_vmem [thread:$0]  %s96, 128, %s99, %s88
        $region20: #{tpu_custom_call.1} parent=15 // pred_fallthru
          _
      $region16: #{tpu_custom_call.1} parent=5 // pred_fallthru
        _
      %p102 = scmp.le.s32.totalorder 1, %s13
      %p103 = scmp.lt.s32.totalorder %s13, 3
      %p104 = pnand %p102, %p103
      %p105 = pneg %p104
      // Predicated region
      $region21: #{tpu_custom_call.1} parent=5 // pred_check
        _
      $region22: #{tpu_custom_call.1} parent=5 // pred_check_branch
        %107 = sbr.rel (%p104) target = $region24
      $region23: #{tpu_custom_call.1} parent=5 // pred_region
        %s108 = ssub.s32 %s13, 1
        %s109 = sand.u32 %s26, 1
        %s110 = scalar_lea.sflag [#allocation3], %s109
        %s111 = sand.u32 %s26, 1
        %s112 = smul.addr %s111, 8
        %s113 = scalar_lea.vmem [#allocation2], %s112
        // Predicated region
        $region25: #{tpu_custom_call.1} parent=23 // pred_check
          %p114 = pneg %p39
        $region26: #{tpu_custom_call.1} parent=23 // pred_check_branch
          %116 = sbr.rel (%p114) target = $region28
        $region27: #{tpu_custom_call.1} parent=23 // pred_region
          %117 = dma.done %s110, 128
        $region28: #{tpu_custom_call.1} parent=23 // pred_fallthru
          _
        %s118 = sand.u32 %s26, 1
        %s119 = scalar_lea.sflag [#allocation3], %s118
        %s120 = sand.u32 %s26, 1
        %s121 = smul.addr %s120, 8
        %s122 = scalar_lea.vmem [#allocation2], %s121
        %p123 = pneg %p39
        %p124 = pneg %p36
        %p125 = pneg %p65
        %p126 = pneg %p62
        %s127 = sand.u32 %s52, 1
        %s128 = scalar_lea.sflag [#allocation4], %s127
        %s129 = sand.u32 %s52, 1
        %s130 = smul.addr %s129, 8
        %s131 = scalar_lea.vmem [#allocation5], %s130
        %v132 = vld [vmem:[%s113] sm:$0xff]
        %v133 = vmul.f32 %v132, 0.5
        %v134 = vtanh.pop %v133
        %v135 = vadd.f32 %v134, 1.0
        %v136 = vmul.f32 %v135, 0.5
        %137 = vst [vmem:[%s131] sm:$0xff] %v136
        %s138 = sand.u32 %s52, 1
        %s139 = scalar_lea.sflag [#allocation4], %s138
        %s140 = sand.u32 %s52, 1
        %s141 = smul.addr %s140, 8
        %s142 = scalar_lea.vmem [#allocation5], %s141
        // Predicated region
        $region29: #{tpu_custom_call.1} parent=23 // pred_check
          %p143 = pneg %p62
        $region30: #{tpu_custom_call.1} parent=23 // pred_check_branch
          %145 = sbr.rel (%p143) target = $region32
        $region31: #{tpu_custom_call.1} parent=23 // pred_region
          %s147 = ssub.s32 128, 128
          %148 = vsyncadd %s139, %s147
          %s149 = smul.addr %s18, 128
          %s150 = scalar_lea.hbm %s1, %s149
          %s152 = sshll.u32 %s142, 4
          %s153 = int_to_ptr.vmem [resolvable:$true] %s152
          %155 = dma.vmem_to_hbm [thread:$0]  %s153, 128, %s150, %s139
        $region32: #{tpu_custom_call.1} parent=23 // pred_fallthru
          _
      $region24: #{tpu_custom_call.1} parent=5 // pred_fallthru
        _
      %p156 = scmp.le.s32.totalorder 2, %s13
      // Predicated region
      $region33: #{tpu_custom_call.1} parent=5 // pred_check
        %p157 = pneg %p156
      $region34: #{tpu_custom_call.1} parent=5 // pred_check_branch
        %159 = sbr.rel (%p157) target = $region36
      $region35: #{tpu_custom_call.1} parent=5 // pred_region
        %s160 = ssub.s32 %s13, 2
        // Predicated region
        $region37: #{tpu_custom_call.1} parent=35 // pred_check
          %p161 = pneg %p68
        $region38: #{tpu_custom_call.1} parent=35 // pred_check_branch
          %163 = sbr.rel (%p161) target = $region40
        $region39: #{tpu_custom_call.1} parent=35 // pred_region
          %s164 = sand.u32 %s53, 1
          %s165 = scalar_lea.sflag [#allocation4], %s164
          %s166 = sand.u32 %s53, 1
          %s167 = smul.addr %s166, 8
          %s168 = scalar_lea.vmem [#allocation5], %s167
          %169 = dma.done %s165, 128
        $region40: #{tpu_custom_call.1} parent=35 // pred_fallthru
          _
      $region36: #{tpu_custom_call.1} parent=5 // pred_fallthru
        _
    $region6: #{tpu_custom_call.1} parent=1 // loop_footer
      %s17 = sadd.s32 1, %s13
    $region7: #{tpu_custom_call.1} parent=1 // loop_footer_branch
      %12 = sbr.rel target = $region3
    $region8: #{tpu_custom_call.1} parent=1 // loop_exit
      _
    %170 = vsyncpa [#allocation3], 1
    %s171 = scalar_lea.sflag [#allocation3], 1
    %172 = vsyncpa %s171, 1
    %173 = vsyncpa [#allocation4], 1
    %s174 = scalar_lea.sflag [#allocation4], 1
    %175 = vsyncpa %s174, 1

</llo_original>
